<compile_context>
chip_gen: v7x
topology: tpu7x:2x2x1
jax: 0.10.0
libtpu: 0.0.40
codegen_flags: <defaults>
</compile_context>

<pallas_src>
import jax
import jax.numpy as jnp
from jax import lax
from jax.experimental import pallas as pl
from jax.experimental.pallas import tpu as pltpu


def _round_up(x: int, m: int) -> int:
    return m * ((x + m - 1) // m)


def _cdiv(a: int, b: int) -> int:
    return -(-a // b)


def critic_kernel(x_ref, w1_ref, b1_ref, w2_ref, b2_ref, o_ref):
    """One batch tile.

    x_ref  : [TB, D]  observation tile (natural [batch, feature] layout)
    w1_ref : [H, D]   fc1 weight (torch [out, in] layout), VMEM-resident
    b1_ref : [H, 1]   fc1 bias column, VMEM-resident
    w2_ref : [H, 1]   fc2 weight column, VMEM-resident
    b2_ref : [1]      fc2 bias, SMEM scalar
    o_ref  : [1, TB]  value estimates, lane-dense row
    """
    # Promote x to f32 in-vreg (no-op on the f32 path; cheap VPU cast on bf16).
    x = x_ref[...].astype(jnp.float32)
    # fc1 on the MXU: contract the feature axis of both operands -> [H, TB];
    # batch ends up on the lane axis without any materialized transpose.
    h = lax.dot_general(
        w1_ref[...], x,
        dimension_numbers=(((1,), (1,)), ((), ())),
        preferred_element_type=jnp.float32,
    )
    # Bias broadcast along lanes (VPU) + tanh (EUP).
    h = jnp.tanh(h + b1_ref[...])
    # fc2 (out_dim == 1): skip the MXU.  VPU elementwise multiply + cross-sublane
    # reduction over the hidden axis (XLU) -> lane-dense [1, TB].
    v = jnp.sum(h * w2_ref[...], axis=0, keepdims=True)
    o_ref[...] = (v + b2_ref[0]).astype(o_ref.dtype)


def critic_forward(x, w1, b1, w2, b2, *, block_b=8192, acts_dtype=None):
    """value = fc2(tanh(fc1(x))) with PyTorch state_dict parameter layout.

    x  : [B, obs_dim]
    w1 : [H, obs_dim], b1 : [H]
    w2 : [1, H],       b2 : [1]
    acts_dtype: optionally cast x (e.g. jnp.bfloat16) to halve its HBM traffic;
                weights / accumulation / tanh stay in f32.
    Returns [B, 1] float32.
    """
    B, D = x.shape
    H = w1.shape[0]
    assert w1.shape == (H, D) and b1.shape == (H,)
    assert w2.shape == (1, H) and b2.shape == (1,)

    # ---- Batch tiling -------------------------------------------------------
    # Pad batch only up to a multiple of 128 (lane width), then fit the tile
    # size to the batch so padding waste stays < one tile.  Keep >= 2 tiles
    # whenever possible so v7x's two TensorCores both get work.
    b128 = _round_up(B, 128)
    tb_target = _round_up(min(block_b, b128), 128)
    num_tiles = max(1, _cdiv(b128, tb_target))
    if num_tiles == 1 and b128 >= 256:
        num_tiles = 2
    tb = _round_up(_cdiv(b128, num_tiles), 128)
    b_pad = num_tiles * tb
    grid = (num_tiles,)

    # ---- Inputs (no transpose; at most a same-layout zero-pad + dtype cast) --
    x_dtype = acts_dtype if acts_dtype is not None else x.dtype
    if b_pad == B and acts_dtype is None:
        x_p = x
    elif b_pad == B:
        x_p = x.astype(x_dtype)
    else:
        x_p = jnp.zeros((b_pad, D), x_dtype).at[:B, :].set(x.astype(x_dtype))

    w1_k = w1                    # already [H, D] (torch stores [out, in]); keep f32
    b1_k = b1.reshape(H, 1).astype(jnp.float32)
    w2_k = w2.reshape(H, 1).astype(jnp.float32)
    b2_k = b2.reshape(1).astype(jnp.float32)     # scalar -> SMEM

    x_itemsize = jnp.dtype(x_dtype).itemsize
    cost = pl.CostEstimate(
        flops=2 * b_pad * D * H + 4 * b_pad * H,
        transcendentals=b_pad * H,
        bytes_accessed=(b_pad * D * x_itemsize           # x read
                        + H * D * 4                      # w1
                        + (2 * H + 1) * 4                # b1, w2, b2
                        + b_pad * 4),                    # output
    )

    # Scoped-VMEM headroom for large user-chosen tiles (v5e default is 16 MiB).
    vmem_need = (2 * tb * D * x_itemsize      # double-buffered x tile
                 + H * D * 4 + 2 * H * 4      # VMEM-resident params
                 + 2 * tb * 4                 # double-buffered output row
                 + 2 * H * tb * 4)            # [H, TB] f32 intermediates
    vmem_limit = int(min(64 * 2**20, max(16 * 2**20, 2 * vmem_need)))

    out = pl.pallas_call(
        critic_kernel,
        out_shape=jax.ShapeDtypeStruct((1, b_pad), jnp.float32),
        grid_spec=pltpu.PrefetchScalarGridSpec(
            num_scalar_prefetch=0,
            grid=grid,
            in_specs=[
                # Batch tile in natural [B, D] layout; pipelined over the grid.
                pl.BlockSpec((tb, D), lambda i: (i, 0)),
                # Parameters: same block every step -> stay VMEM-resident.
                pl.BlockSpec((H, D), lambda i: (0, 0)),
                pl.BlockSpec((H, 1), lambda i: (0, 0)),
                pl.BlockSpec((H, 1), lambda i: (0, 0)),
                # Scalar fc2 bias in SMEM (no VMEM tile for a single float).
                pl.BlockSpec(memory_space=pltpu.MemorySpace.SMEM),
            ],
            out_specs=pl.BlockSpec((1, tb), lambda i: (0, i)),
        ),
        compiler_params=pltpu.CompilerParams(
            # Independent batch tiles -> shard across v7x's 2 TensorCores.
            dimension_semantics=("parallel",),
            vmem_limit_bytes=vmem_limit,
        ),
        cost_estimate=cost,
    )(x_p, w1_k, b1_k, w2_k, b2_k)

    return out[0, :B].reshape(B, 1)


def init_critic_params(key, obs_dim, hidden=64, out_dim=1):
    """Deterministic synthetic init, PyTorch Linear layout & uniform bounds."""
    k1, k2, k3, k4 = jax.random.split(key, 4)
    bound1 = 1.0 / jnp.sqrt(obs_dim)
    bound2 = 1.0 / jnp.sqrt(hidden)
    w1 = jax.random.uniform(k1, (hidden, obs_dim), jnp.float32, -bound1, bound1)
    b1 = jax.random.uniform(k2, (hidden,), jnp.float32, -bound1, bound1)
    w2 = jax.random.uniform(k3, (out_dim, hidden), jnp.float32, -bound2, bound2)
    b2 = jax.random.uniform(k4, (out_dim,), jnp.float32, -bound2, bound2)
    return w1, b1, w2, b2


def critic_reference(x, w1, b1, w2, b2):
    h = jnp.tanh(x @ w1.T + b1)
    return h @ w2.T + b2


if __name__ == "__main__":
    key = jax.random.PRNGKey(0)
    k_obs, k_obs2, k_params = jax.random.split(key, 3)

    obs_dim = 16

    w1, b1, w2, b2 = init_critic_params(k_params, obs_dim)

    # --- small batch (single tile, grid=1) -----------------------------------
    batch = 8
    observation = jax.random.normal(k_obs, (batch, obs_dim), jnp.float32)
    ref = critic_reference(observation, w1, b1, w2, b2)

    value = jax.block_until_ready(critic_forward(observation, w1, b1, w2, b2))
    assert value.shape == (batch, 1)
    assert jnp.allclose(value, ref, atol=1e-4, rtol=1e-4)

    # bf16 x path (HBM-bandwidth fast path); f32 weights/accumulate, looser tol.
    value_bf16 = jax.block_until_ready(
        critic_forward(observation, w1, b1, w2, b2, acts_dtype=jnp.bfloat16))
    assert value_bf16.shape == (batch, 1)
    assert jnp.allclose(value_bf16, ref, atol=5e-2, rtol=5e-2)

    # --- batch that exercises padding + a multi-tile ("parallel") grid -------
    batch2 = 300
    observation2 = jax.random.normal(k_obs2, (batch2, obs_dim), jnp.float32)
    ref2 = critic_reference(observation2, w1, b1, w2, b2)

    value2 = jax.block_until_ready(critic_forward(observation2, w1, b1, w2, b2))
    assert value2.shape == (batch2, 1)
    assert jnp.allclose(value2, ref2, atol=1e-4, rtol=1e-4)

    print("KERNEL_OK")
</pallas_src>

<mosaic_0001>
module attributes {stable_mosaic.version = 11 : i64} {
  func.func @critic_kernel(%arg0: i32, %arg1: memref<128x16xf32, #tpu.memory_space<vmem>>, %arg2: memref<64x16xf32, #tpu.memory_space<vmem>>, %arg3: memref<64x1xf32, #tpu.memory_space<vmem>>, %arg4: memref<64x1xf32, #tpu.memory_space<vmem>>, %arg5: memref<1xf32, #tpu.memory_space<smem>>, %arg6: memref<1x128xf32, #tpu.memory_space<vmem>>) attributes {dimension_semantics = [#tpu.dimension_semantics<parallel>], iteration_bounds = array<i64: 1>, scalar_prefetch = 0 : i64, scratch_operands = 0 : i64, tpu.core_type = #tpu.core_type<tc>, window_params = [{transform_indices = @transform_0, window_bounds = array<i64: 128, 16>}, {pipeline_mode = #tpu.pipeline_mode<synchronous>, transform_indices = @transform_1, window_bounds = array<i64: 64, 16>}, {pipeline_mode = #tpu.pipeline_mode<synchronous>, transform_indices = @transform_2, window_bounds = array<i64: 64, 1>}, {pipeline_mode = #tpu.pipeline_mode<synchronous>, transform_indices = @transform_3, window_bounds = array<i64: 64, 1>}, {transform_indices = @transform_4, window_bounds = array<i64: 1>}, {transform_indices = @transform_5, window_bounds = array<i64: 1, 128>}]} {
    %c0 = arith.constant 0 : index
    %c0_0 = arith.constant 0 : index
    %0 = vector.load %arg1[%c0, %c0_0] : memref<128x16xf32, #tpu.memory_space<vmem>>, vector<128x16xf32>
    %c0_1 = arith.constant 0 : index
    %c0_2 = arith.constant 0 : index
    %1 = vector.load %arg2[%c0_1, %c0_2] : memref<64x16xf32, #tpu.memory_space<vmem>>, vector<64x16xf32>
    %cst = arith.constant dense<0.000000e+00> : vector<64x128xf32>
    %2 = tpu.matmul %1, %0, %cst {dimension_numbers = #tpu.dot_dimension_numbers<[1], [1], [0], [0], [0, 0, 1, 0], [], []>} : vector<64x16xf32>, vector<128x16xf32>, vector<64x128xf32> -> vector<64x128xf32>
    %c0_3 = arith.constant 0 : index
    %c0_4 = arith.constant 0 : index
    %3 = vector.load %arg3[%c0_3, %c0_4] : memref<64x1xf32, #tpu.memory_space<vmem>>, vector<64x1xf32>
    %4 = vector.broadcast %3 : vector<64x1xf32> to vector<64x128xf32>
    %5 = arith.addf %2, %4 : vector<64x128xf32>
    %6 = math.tanh %5 : vector<64x128xf32>
    %c0_5 = arith.constant 0 : index
    %c0_6 = arith.constant 0 : index
    %7 = vector.load %arg4[%c0_5, %c0_6] : memref<64x1xf32, #tpu.memory_space<vmem>>, vector<64x1xf32>
    %8 = vector.broadcast %7 : vector<64x1xf32> to vector<64x128xf32>
    %9 = arith.mulf %6, %8 : vector<64x128xf32>
    %cst_7 = arith.constant dense<0.000000e+00> : vector<128xf32>
    %10 = vector.multi_reduction <add>, %9, %cst_7 [0] : vector<64x128xf32> to vector<128xf32>
    %11 = vector.shape_cast %10 : vector<128xf32> to vector<1x128xf32>
    %c0_8 = arith.constant 0 : index
    %12 = memref.load %arg5[%c0_8] : memref<1xf32, #tpu.memory_space<smem>>
    %13 = vector.broadcast %12 : f32 to vector<1x128xf32>
    %14 = arith.addf %11, %13 : vector<1x128xf32>
    %c0_9 = arith.constant 0 : index
    %c0_10 = arith.constant 0 : index
    %15 = vector.load %arg6[%c0_9, %c0_10] : memref<1x128xf32, #tpu.memory_space<vmem>>, vector<1x128xf32>
    tpu.vector_store %arg6[%c0_9, %c0_10], %14 {strides = array<i32>} : memref<1x128xf32, #tpu.memory_space<vmem>>, vector<1x128xf32>,
    return
  }
  func.func @transform_0(%arg0: i32) -> (i32, i32) {
    %c0_i32 = arith.constant 0 : i32
    %c0_i32_0 = arith.constant 0 : i32
    return %arg0, %c0_i32 : i32, i32
  }
  func.func @transform_1(%arg0: i32) -> (i32, i32) {
    %c0_i32 = arith.constant 0 : i32
    %c0_i32_0 = arith.constant 0 : i32
    %c0_i32_1 = arith.constant 0 : i32
    return %c0_i32, %c0_i32_0 : i32, i32
  }
  func.func @transform_2(%arg0: i32) -> (i32, i32) {
    %c0_i32 = arith.constant 0 : i32
    %c0_i32_0 = arith.constant 0 : i32
    %c0_i32_1 = arith.constant 0 : i32
    return %c0_i32, %c0_i32_0 : i32, i32
  }
  func.func @transform_3(%arg0: i32) -> (i32, i32) {
    %c0_i32 = arith.constant 0 : i32
    %c0_i32_0 = arith.constant 0 : i32
    %c0_i32_1 = arith.constant 0 : i32
    return %c0_i32, %c0_i32_0 : i32, i32
  }
  func.func @transform_4(%arg0: i32) -> i32 {
    %c0_i32 = arith.constant 0 : i32
    %c0_i32_0 = arith.constant 0 : i32
    return %c0_i32 : i32
  }
  func.func @transform_5(%arg0: i32) -> (i32, i32) {
    %c0_i32 = arith.constant 0 : i32
    %c0_i32_0 = arith.constant 0 : i32
    return %c0_i32, %arg0 : i32, i32
  }
}

</mosaic_0001>

<llo_original>
// kernel: tpu_custom_call.1
$region0: #{tpu_custom_call.1}
  #allocation0 [shape = 'u32[]', space=smem, size = 0x4, offset = 0x4, fixed_abs, tag = 'smem constant byte address 0x4 - core index']
  #allocation1 [shape = 'u32[144,128]{1,0:T(1,128)}', space=vmem, size = 0x12000, scoped, tag = 'internal scratch']
  #allocation2 [shape = 'f32[1]{0:T(128)S(6)}', space=smem, size = 0x200, scoped, tag = 'scoped memory for tpu_custom_call.1']
  %s0 = inlined_call_operand.vmem [shape: f32[128,16], index: 0, kind: input, shape index: {}]
  %s1 = inlined_call_operand.vmem [shape: f32[64,16], index: 1, kind: input, shape index: {}]
  %s2 = inlined_call_operand.vmem [shape: f32[64,1], index: 2, kind: input, shape index: {}]
  %s3 = inlined_call_operand.vmem [shape: f32[64,1], index: 3, kind: input, shape index: {}]
  %s4 = inlined_call_operand.<no memory space> [shape: f32[1], index: 4, kind: input, shape index: {}]
  %s5 = inlined_call_operand.hbm [shape: f32[1,128], index: 5, kind: output, shape index: {}]
  %s6 = sld [smem:[#allocation0]]
  $region30: #{tpu_custom_call.1} parent=0
    _
  %s8 = ssub.s32 1, %s6
  %s9 = scalar_select 0, %s8, %s6
  %10 = sst [smem:[#allocation2]] %s4
  $region1: #{tpu_custom_call.1} parent=0
    #allocation3 [shape = 'u8[512]{0}', space=vmem, size = 0x400, scoped, tag = 'output window, operand 0, single buffered']
    #allocation4 [shape = 's32[1]{0}', space=sflag, size = 0x4, scoped, tag = 'scoped memory for tpu_custom_call.1']
    %11 = vsyncpa [#allocation4], 0
    // Predicated region
    $region2: #{tpu_custom_call.1} parent=1 // pred_check
      _
    $region3: #{tpu_custom_call.1} parent=1 // pred_check_branch
      %13 = sbr.rel (0) target = $region5
    $region4: #{tpu_custom_call.1} parent=1 // pred_region
      _
    $region5: #{tpu_custom_call.1} parent=1 // pred_fallthru
      _
    // Predicated region
    $region6: #{tpu_custom_call.1} parent=1 // pred_check
      _
    $region7: #{tpu_custom_call.1} parent=1 // pred_check_branch
      %15 = sbr.rel (0) target = $region9
    $region8: #{tpu_custom_call.1} parent=1 // pred_region
      _
    $region9: #{tpu_custom_call.1} parent=1 // pred_fallthru
      _
    // Predicated region
    $region10: #{tpu_custom_call.1} parent=1 // pred_check
      _
    $region11: #{tpu_custom_call.1} parent=1 // pred_check_branch
      %17 = sbr.rel (0) target = $region13
    $region12: #{tpu_custom_call.1} parent=1 // pred_region
      _
    $region13: #{tpu_custom_call.1} parent=1 // pred_fallthru
      _
    // Predicated region
    $region14: #{tpu_custom_call.1} parent=1 // pred_check
      _
    $region15: #{tpu_custom_call.1} parent=1 // pred_check_branch
      %19 = sbr.rel (0) target = $region17
    $region16: #{tpu_custom_call.1} parent=1 // pred_region
      _
    $region17: #{tpu_custom_call.1} parent=1 // pred_fallthru
      _
    // Predicated region
    $region18: #{tpu_custom_call.1} parent=1 // pred_check
      _
    $region19: #{tpu_custom_call.1} parent=1 // pred_check_branch
      %21 = sbr.rel (0) target = $region21
    $region20: #{tpu_custom_call.1} parent=1 // pred_region
      _
    $region21: #{tpu_custom_call.1} parent=1 // pred_fallthru
      _
    %v22 = vld [vmem:[%s0] sm:$0xff]
    %v23 = vld [vmem:[%s0 + $0x8] sm:$0xff]
    %v24 = vld [vmem:[%s0 + $0x10] sm:$0xff]
    %v25 = vld [vmem:[%s0 + $0x18] sm:$0xff]
    %v26 = vld [vmem:[%s0 + $0x20] sm:$0xff]
    %v27 = vld [vmem:[%s0 + $0x28] sm:$0xff]
    %v28 = vld [vmem:[%s0 + $0x30] sm:$0xff]
    %v29 = vld [vmem:[%s0 + $0x38] sm:$0xff]
    %v30 = vld [vmem:[%s0 + $0x40] sm:$0xff]
    %v31 = vld [vmem:[%s0 + $0x48] sm:$0xff]
    %v32 = vld [vmem:[%s0 + $0x50] sm:$0xff]
    %v33 = vld [vmem:[%s0 + $0x58] sm:$0xff]
    %v34 = vld [vmem:[%s0 + $0x60] sm:$0xff]
    %v35 = vld [vmem:[%s0 + $0x68] sm:$0xff]
    %v36 = vld [vmem:[%s0 + $0x70] sm:$0xff]
    %v37 = vld [vmem:[%s0 + $0x78] sm:$0xff]
    %v38 = vld [vmem:[%s1] sm:$0xff]
    %v39 = vld [vmem:[%s1 + $0x8] sm:$0xff]
    %v40 = vld [vmem:[%s1 + $0x10] sm:$0xff]
    %v41 = vld [vmem:[%s1 + $0x18] sm:$0xff]
    %v42 = vld [vmem:[%s1 + $0x20] sm:$0xff]
    %v43 = vld [vmem:[%s1 + $0x28] sm:$0xff]
    %v44 = vld [vmem:[%s1 + $0x30] sm:$0xff]
    %v45 = vld [vmem:[%s1 + $0x38] sm:$0xff]
    %v46 = vld [vmem:[%s2] sm:$0xff]
    %v47 = vld [vmem:[%s2 + $0x8] sm:$0xff]
    %v48 = vld [vmem:[%s2 + $0x10] sm:$0xff]
    %v49 = vld [vmem:[%s2 + $0x18] sm:$0xff]
    %v50 = vld [vmem:[%s2 + $0x20] sm:$0xff]
    %v51 = vld [vmem:[%s2 + $0x28] sm:$0xff]
    %v52 = vld [vmem:[%s2 + $0x30] sm:$0xff]
    %v53 = vld [vmem:[%s2 + $0x38] sm:$0xff]
    %55 = vset.pattern.permute.xlu0 0
    %56 = vperm.xlu0 %55, %v46
    %v57 = vpop.permute.xlu0 %56
    %60 = vset.pattern.permute.xlu0 0
    %61 = vperm.xlu0 %60, %v47
    %v62 = vpop.permute.xlu0 %61
    %65 = vset.pattern.permute.xlu0 0
    %66 = vperm.xlu0 %65, %v48
    %v67 = vpop.permute.xlu0 %66
    %70 = vset.pattern.permute.xlu0 0
    %71 = vperm.xlu0 %70, %v49
    %v72 = vpop.permute.xlu0 %71
    %75 = vset.pattern.permute.xlu0 0
    %76 = vperm.xlu0 %75, %v50
    %v77 = vpop.permute.xlu0 %76
    %80 = vset.pattern.permute.xlu0 0
    %81 = vperm.xlu0 %80, %v51
    %v82 = vpop.permute.xlu0 %81
    %85 = vset.pattern.permute.xlu0 0
    %86 = vperm.xlu0 %85, %v52
    %v87 = vpop.permute.xlu0 %86
    %90 = vset.pattern.permute.xlu0 0
    %91 = vperm.xlu0 %90, %v53
    %v92 = vpop.permute.xlu0 %91
    %vm94 = vcmask 130048
    %v96 = vsel %vm94, %v38, 0
    %v99 = vsel %vm94, %v39, 0
    %v102 = vsel %vm94, %v40, 0
    %v105 = vsel %vm94, %v41, 0
    %v108 = vsel %vm94, %v42, 0
    %v111 = vsel %vm94, %v43, 0
    %v114 = vsel %vm94, %v44, 0
    %v117 = vsel %vm94, %v45, 0
    %v120 = vsel %vm94, %v22, 0
    %v123 = vsel %vm94, %v23, 0
    %v126 = vsel %vm94, %v24, 0
    %v129 = vsel %vm94, %v25, 0
    %v132 = vsel %vm94, %v26, 0
    %v135 = vsel %vm94, %v27, 0
    %v138 = vsel %vm94, %v28, 0
    %v141 = vsel %vm94, %v29, 0
    %v144 = vsel %vm94, %v30, 0
    %v147 = vsel %vm94, %v31, 0
    %v150 = vsel %vm94, %v32, 0
    %v153 = vsel %vm94, %v33, 0
    %v156 = vsel %vm94, %v34, 0
    %v159 = vsel %vm94, %v35, 0
    %v162 = vsel %vm94, %v36, 0
    %v165 = vsel %vm94, %v37, 0
    %167 = vmatprep.subr.mxu0 0.0
    %168 = vmatpush1.xpose.msra.mxu0 %v120
    %169 = vmatprep.subr.mxu0 0.0
    %170 = vmatpush1.xpose.msra.mxu0 %v123
    %171 = vmatprep.subr.mxu0 0.0
    %172 = vmatpush1.xpose.msra.mxu0 %v126
    %173 = vmatprep.subr.mxu0 0.0
    %174 = vmatpush1.xpose.msra.mxu0 %v129
    %175 = vmatprep.subr.mxu0 0.0
    %176 = vmatpush1.xpose.msra.mxu0 %v132
    %177 = vmatprep.subr.mxu0 0.0
    %178 = vmatpush1.xpose.msra.mxu0 %v135
    %179 = vmatprep.subr.mxu0 0.0
    %180 = vmatpush1.xpose.msra.mxu0 %v138
    %181 = vmatprep.subr.mxu0 0.0
    %182 = vmatpush1.xpose.msra.mxu0 %v141
    %183 = vmatprep.subr.mxu0 0.0
    %184 = vmatpush1.xpose.msra.mxu0 %v144
    %185 = vmatprep.subr.mxu0 0.0
    %186 = vmatpush1.xpose.msra.mxu0 %v147
    %187 = vmatprep.subr.mxu0 0.0
    %188 = vmatpush1.xpose.msra.mxu0 %v150
    %189 = vmatprep.subr.mxu0 0.0
    %190 = vmatpush1.xpose.msra.mxu0 %v153
    %191 = vmatprep.subr.mxu0 0.0
    %192 = vmatpush1.xpose.msra.mxu0 %v156
    %193 = vmatprep.subr.mxu0 0.0
    %194 = vmatpush1.xpose.msra.mxu0 %v159
    %195 = vmatprep.subr.mxu0 0.0
    %196 = vmatpush1.xpose.msra.mxu0 %v162
    %197 = vmatprep.subr.mxu0 0.0
    %198 = vmatpush1.xpose.msra.mxu0 %v165
    %199 = vmatprep.subr.mxu0 0.0
    %200 = vmatpush1.xpose.msra.mxu0 0.0
    %201 = vmatprep.subr.mxu0 0.0
    %202 = vmatpush1.xpose.msra.mxu0 0.0
    %203 = vmatprep.subr.mxu0 0.0
    %204 = vmatpush1.xpose.msra.mxu0 0.0
    %205 = vmatprep.subr.mxu0 0.0
    %206 = vmatpush1.xpose.msra.mxu0 0.0
    %207 = vmatprep.subr.mxu0 0.0
    %208 = vmatpush1.xpose.msra.mxu0 0.0
    %209 = vmatprep.subr.mxu0 0.0
    %210 = vmatpush1.xpose.msra.mxu0 0.0
    %211 = vmatprep.subr.mxu0 0.0
    %212 = vmatpush1.xpose.msra.mxu0 0.0
    %213 = vmatprep.subr.mxu0 0.0
    %214 = vmatpush1.xpose.msra.mxu0 0.0
    %215 = vmatprep.subr.mxu0 0.0
    %216 = vmatpush1.xpose.msra.mxu0 0.0
    %217 = vmatprep.subr.mxu0 0.0
    %218 = vmatpush1.xpose.msra.mxu0 0.0
    %219 = vmatprep.subr.mxu0 0.0
    %220 = vmatpush1.xpose.msra.mxu0 0.0
    %221 = vmatprep.subr.mxu0 0.0
    %222 = vmatpush1.xpose.msra.mxu0 0.0
    %223 = vmatprep.subr.mxu0 0.0
    %224 = vmatpush1.xpose.msra.mxu0 0.0
    %225 = vmatprep.subr.mxu0 0.0
    %226 = vmatpush1.xpose.msra.mxu0 0.0
    %227 = vmatprep.subr.mxu0 0.0
    %228 = vmatpush1.xpose.msra.mxu0 0.0
    %229 = vmatprep.subr.mxu0 0.0
    %230 = vmatpush1.xpose.msra.mxu0 0.0
    %231 = vmatprep.mubr.f32.mxu0 0.0
    %232 = vmatmul.mubr.f32.gmra.mrb[0].mxu0 %v96
    %v233 = vpop.f32.mrb[0].mxu0
    %v234 = vadd.f32 %v57, %v233
    %v235 = vpop.f32.mrb[0].mxu0
    %236 = vmatprep.mubr.f32.mxu0 0.0
    %237 = vmatmul.mubr.f32.gmra.mrb[0].mxu0 %v99
    %v238 = vpop.f32.mrb[0].mxu0
    %v239 = vadd.f32 %v62, %v238
    %v240 = vpop.f32.mrb[0].mxu0
    %241 = vmatprep.mubr.f32.mxu0 0.0
    %242 = vmatmul.mubr.f32.gmra.mrb[0].mxu0 %v102
    %v243 = vpop.f32.mrb[0].mxu0
    %v244 = vadd.f32 %v67, %v243
    %v245 = vpop.f32.mrb[0].mxu0
    %246 = vmatprep.mubr.f32.mxu0 0.0
    %247 = vmatmul.mubr.f32.gmra.mrb[0].mxu0 %v105
    %v248 = vpop.f32.mrb[0].mxu0
    %v249 = vadd.f32 %v72, %v248
    %v250 = vpop.f32.mrb[0].mxu0
    %251 = vmatprep.mubr.f32.mxu0 0.0
    %252 = vmatmul.mubr.f32.gmra.mrb[0].mxu0 %v108
    %v253 = vpop.f32.mrb[0].mxu0
    %v254 = vadd.f32 %v77, %v253
    %v255 = vpop.f32.mrb[0].mxu0
    %256 = vmatprep.mubr.f32.mxu0 0.0
    %257 = vmatmul.mubr.f32.gmra.mrb[0].mxu0 %v111
    %v258 = vpop.f32.mrb[0].mxu0
    %v259 = vadd.f32 %v82, %v258
    %v260 = vpop.f32.mrb[0].mxu0
    %261 = vmatprep.mubr.f32.mxu0 0.0
    %262 = vmatmul.mubr.f32.gmra.mrb[0].mxu0 %v114
    %v263 = vpop.f32.mrb[0].mxu0
    %v264 = vadd.f32 %v87, %v263
    %v265 = vpop.f32.mrb[0].mxu0
    %266 = vmatprep.mubr.f32.mxu0 0.0
    %267 = vmatmul.mubr.f32.gmra.mrb[0].mxu0 %v117
    %v268 = vpop.f32.mrb[0].mxu0
    %v269 = vadd.f32 %v92, %v268
    %v270 = vpop.f32.mrb[0].mxu0
    %271 = vdwg.mxu0
    %v272 = vtanh.pop %v234
    %v273 = vtanh.pop %v239
    %v274 = vtanh.pop %v244
    %v275 = vtanh.pop %v249
    %v276 = vtanh.pop %v254
    %v277 = vtanh.pop %v259
    %v278 = vtanh.pop %v264
    %v279 = vtanh.pop %v269
    %v280 = vld [vmem:[%s3] sm:$0xff]
    %v281 = vld [vmem:[%s3 + $0x8] sm:$0xff]
    %v282 = vld [vmem:[%s3 + $0x10] sm:$0xff]
    %v283 = vld [vmem:[%s3 + $0x18] sm:$0xff]
    %v284 = vld [vmem:[%s3 + $0x20] sm:$0xff]
    %v285 = vld [vmem:[%s3 + $0x28] sm:$0xff]
    %v286 = vld [vmem:[%s3 + $0x30] sm:$0xff]
    %v287 = vld [vmem:[%s3 + $0x38] sm:$0xff]
    %289 = vset.pattern.permute.xlu0 0
    %290 = vperm.xlu0 %289, %v280
    %v291 = vpop.permute.xlu0 %290
    %294 = vset.pattern.permute.xlu0 0
    %295 = vperm.xlu0 %294, %v281
    %v296 = vpop.permute.xlu0 %295
    %299 = vset.pattern.permute.xlu0 0
    %300 = vperm.xlu0 %299, %v282
    %v301 = vpop.permute.xlu0 %300
    %304 = vset.pattern.permute.xlu0 0
    %305 = vperm.xlu0 %304, %v283
    %v306 = vpop.permute.xlu0 %305
    %309 = vset.pattern.permute.xlu0 0
    %310 = vperm.xlu0 %309, %v284
    %v311 = vpop.permute.xlu0 %310
    %314 = vset.pattern.permute.xlu0 0
    %315 = vperm.xlu0 %314, %v285
    %v316 = vpop.permute.xlu0 %315
    %319 = vset.pattern.permute.xlu0 0
    %320 = vperm.xlu0 %319, %v286
    %v321 = vpop.permute.xlu0 %320
    %324 = vset.pattern.permute.xlu0 0
    %325 = vperm.xlu0 %324, %v287
    %v326 = vpop.permute.xlu0 %325
    %v328 = vmul.f32 %v272, %v291
    %v329 = vmul.f32 %v273, %v296
    %v330 = vmul.f32 %v274, %v301
    %v331 = vmul.f32 %v275, %v306
    %v332 = vmul.f32 %v276, %v311
    %v333 = vmul.f32 %v277, %v316
    %v334 = vmul.f32 %v278, %v321
    %v335 = vmul.f32 %v279, %v326
    %v336 = vadd.f32 %v328, %v329
    %v337 = vadd.f32 %v336, %v330
    %v338 = vadd.f32 %v337, %v331
    %v339 = vadd.f32 %v338, %v332
    %v340 = vadd.f32 %v339, %v333
    %v341 = vadd.f32 %v340, %v334
    %v342 = vadd.f32 %v341, %v335
    %v343 = vrot.slane %v342, 4
    %v344 = vadd.f32 %v342, %v343
    %v345 = vrot.slane %v344, 2
    %v346 = vadd.f32 %v344, %v345
    %v347 = vrot.slane %v346, 1
    %v348 = vadd.f32 %v346, %v347
    %s349 = sld [smem:[#allocation2]]
    %v350 = vstv %s349
    %v351 = vadd.f32 %v348, %v350
    %352 = vst [vmem:[#allocation3] sm:$0x1] %v351
    // Predicated region
    $region22: #{tpu_custom_call.1} parent=1 // pred_check
      _
    $region23: #{tpu_custom_call.1} parent=1 // pred_check_branch
      %354 = sbr.rel (0) target = $region25
    $region24: #{tpu_custom_call.1} parent=1 // pred_region
      %s356 = ssub.s32 16, 16
      %357 = vsyncadd [#allocation4], %s356
      %s359 = sshll.u32 [#allocation3], 4
      %s360 = int_to_ptr.vmem [resolvable:$true] %s359
      %362 = dma.vmem_to_hbm [thread:$0]  %s360, 16, %s5, [#allocation4]
    $region25: #{tpu_custom_call.1} parent=1 // pred_fallthru
      _
    // Predicated region
    $region26: #{tpu_custom_call.1} parent=1 // pred_check
      _
    $region27: #{tpu_custom_call.1} parent=1 // pred_check_branch
      %364 = sbr.rel (0) target = $region29
    $region28: #{tpu_custom_call.1} parent=1 // pred_region
      %365 = dma.done [#allocation4], 16
    $region29: #{tpu_custom_call.1} parent=1 // pred_fallthru
      _
    %366 = vsyncpa [#allocation4], 1

</llo_original>
